<compile_context>
chip_gen: v7x
topology: tpu7x:2x2x1
jax: 0.10.0
libtpu: 0.0.40
codegen_flags: <defaults>
</compile_context>

<pallas_src>
import functools

import jax
import jax.numpy as jnp
from jax import lax
from jax.experimental import pallas as pl
from jax.experimental.pallas import tpu as pltpu


def _round_up(x, m):
    return ((x + m - 1) // m) * m


def _softplus(x):
    # Thresholded softplus (matches torch.nn.functional.softplus behaviour):
    # for large x, softplus(x) ~= x; avoids exp overflow -> inf/NaN.
    safe = jnp.minimum(x, 20.0)
    return jnp.where(x > 20.0, x, jnp.log1p(jnp.exp(safe)))


def linearvb_kernel(x_ref, mu_w_ref, rho_w_ref, eps_w_ref,
                    mu_b_ref, rho_b_ref, eps_b_ref, o_ref,
                    w_scr, b_scr):
    # Sample the posterior weights/bias once (grid-invariant) into VMEM scratch.
    @pl.when(pl.program_id(0) == 0)
    def _():
        w_scr[...] = mu_w_ref[...] + _softplus(rho_w_ref[...]) * eps_w_ref[...]
        b_scr[...] = mu_b_ref[...] + _softplus(rho_b_ref[...]) * eps_b_ref[...]

    # F.linear: X @ W.T + b. Express the contraction directly (contract the
    # `in_features` axis of both operands) so no transpose is materialized.
    acc = lax.dot_general(
        x_ref[...], w_scr[...],
        dimension_numbers=(((1,), (1,)), ((), ())),
        preferred_element_type=jnp.float32)
    o_ref[...] = (acc + b_scr[...]).astype(o_ref.dtype)


@functools.partial(jax.jit, static_argnames=("block_m",))
def linearvb_forward(x, mu_w, rho_w, eps_w, mu_b, rho_b, eps_b, *, block_m=None):
    n, in_f = x.shape
    out_f = mu_w.shape[0]
    dtype = x.dtype

    # ---- lane-dense output: pad out_features up to a multiple of 128 --------
    out_p = _round_up(out_f, 128)
    pad_o = out_p - out_f
    if pad_o:
        # Padded rows: mu = 0 and eps = 0  ->  sampled weight/bias rows are 0,
        # so the extra output columns are exactly 0 and can be sliced away.
        mu_w = jnp.pad(mu_w, ((0, pad_o), (0, 0)))
        rho_w = jnp.pad(rho_w, ((0, pad_o), (0, 0)))
        eps_w = jnp.pad(eps_w, ((0, pad_o), (0, 0)))
        mu_b = jnp.pad(mu_b, (0, pad_o))
        rho_b = jnp.pad(rho_b, (0, pad_o))
        eps_b = jnp.pad(eps_b, (0, pad_o))

    mu_b2 = mu_b.reshape(1, out_p)
    rho_b2 = rho_b.reshape(1, out_p)
    eps_b2 = eps_b.reshape(1, out_p)

    # ---- row tiling ----------------------------------------------------------
    if block_m is None:
        block_m = min(512, _round_up(n, 8))
    grid_m = pl.cdiv(n, block_m)

    cost = pl.CostEstimate(
        flops=2 * n * in_f * out_p + 3 * out_p * in_f,
        transcendentals=2 * (out_p * in_f + out_p),     # exp + log1p per element
        bytes_accessed=(x.size + 3 * out_p * in_f + 3 * out_p + n * out_p) * 4,
    )

    out = pl.pallas_call(
        linearvb_kernel,
        out_shape=jax.ShapeDtypeStruct((n, out_p), dtype),
        grid_spec=pltpu.PrefetchScalarGridSpec(
            num_scalar_prefetch=0,
            grid=(grid_m,),
            in_specs=[
                pl.BlockSpec((block_m, in_f), lambda i: (i, 0)),   # X row tile
                pl.BlockSpec((out_p, in_f), lambda i: (0, 0)),     # mu_w (resident)
                pl.BlockSpec((out_p, in_f), lambda i: (0, 0)),     # rho_w
                pl.BlockSpec((out_p, in_f), lambda i: (0, 0)),     # eps_w
                pl.BlockSpec((1, out_p), lambda i: (0, 0)),        # mu_b
                pl.BlockSpec((1, out_p), lambda i: (0, 0)),        # rho_b
                pl.BlockSpec((1, out_p), lambda i: (0, 0)),        # eps_b
            ],
            out_specs=pl.BlockSpec((block_m, out_p), lambda i: (i, 0)),
            scratch_shapes=[
                pltpu.VMEM((out_p, in_f), jnp.float32),            # sampled W
                pltpu.VMEM((1, out_p), jnp.float32),               # sampled b
            ],
        ),
        compiler_params=pltpu.CompilerParams(
            # "arbitrary": the sampled-weight scratch is initialized only at
            # program_id==0, so the row axis must run sequentially on one core.
            dimension_semantics=("arbitrary",)),
        cost_estimate=cost,
    )(x, mu_w, rho_w, eps_w, mu_b2, rho_b2, eps_b2)

    return out[:, :out_f] if pad_o else out


if __name__ == "__main__":
    # Small shapes consistent with the module: batch=16, in_features=32, out_features=16.
    N, IN_F, OUT_F = 16, 32, 16

    key = jax.random.PRNGKey(0)
    k_x, k_muw, k_mub, k_epsw, k_epsb = jax.random.split(key, 5)

    # Deterministic parameter init mimicking Vil.init_mu / Vil.init_rho:
    #   mu ~ N(0, 1/sqrt(Ninput)),  rho = log(exp(sigma_prior) - 1) (constant).
    sigma_prior = 0.1
    mu_weight = jax.random.normal(k_muw, (OUT_F, IN_F), jnp.float32) / jnp.sqrt(IN_F)
    rho_weight = jnp.full((OUT_F, IN_F), jnp.log(jnp.expm1(sigma_prior)), jnp.float32)
    mu_bias = jax.random.normal(k_mub, (OUT_F,), jnp.float32) / jnp.sqrt(IN_F)
    rho_bias = jnp.full((OUT_F,), jnp.log(jnp.expm1(sigma_prior)), jnp.float32)

    # Reparametrization noise (the "sample_posterior" draw), fixed by the PRNG key.
    eps_weight = jax.random.normal(k_epsw, (OUT_F, IN_F), jnp.float32)
    eps_bias = jax.random.normal(k_epsb, (OUT_F,), jnp.float32)

    x = jax.random.normal(k_x, (N, IN_F), jnp.float32)

    out = linearvb_forward(x, mu_weight, rho_weight, eps_weight,
                           mu_bias, rho_bias, eps_bias)
    out = jax.block_until_ready(out)

    # Pure-JAX reference (same math as the PyTorch forward).
    w_ref = mu_weight + jnp.log1p(jnp.exp(rho_weight)) * eps_weight
    b_ref = mu_bias + jnp.log1p(jnp.exp(rho_bias)) * eps_bias
    ref = x @ w_ref.T + b_ref
    assert out.shape == (N, OUT_F)
    assert jnp.allclose(out, ref, atol=1e-5, rtol=1e-5), "mismatch vs reference"

    print("KERNEL_OK")
</pallas_src>

<mosaic_0001>
module attributes {stable_mosaic.version = 11 : i64} {
  func.func @linearvb_kernel(%arg0: i32, %arg1: memref<16x32xf32, #tpu.memory_space<vmem>>, %arg2: memref<128x32xf32, #tpu.memory_space<vmem>>, %arg3: memref<128x32xf32, #tpu.memory_space<vmem>>, %arg4: memref<128x32xf32, #tpu.memory_space<vmem>>, %arg5: memref<1x128xf32, #tpu.memory_space<vmem>>, %arg6: memref<1x128xf32, #tpu.memory_space<vmem>>, %arg7: memref<1x128xf32, #tpu.memory_space<vmem>>, %arg8: memref<16x128xf32, #tpu.memory_space<vmem>>, %arg9: memref<128x32xf32, #tpu.memory_space<vmem>>, %arg10: memref<1x128xf32, #tpu.memory_space<vmem>>) attributes {dimension_semantics = [#tpu.dimension_semantics<arbitrary>], iteration_bounds = array<i64: 1>, scalar_prefetch = 0 : i64, scratch_operands = 2 : i64, tpu.core_type = #tpu.core_type<tc>, window_params = [{transform_indices = @transform_0, window_bounds = array<i64: 16, 32>}, {pipeline_mode = #tpu.pipeline_mode<synchronous>, transform_indices = @transform_1, window_bounds = array<i64: 128, 32>}, {pipeline_mode = #tpu.pipeline_mode<synchronous>, transform_indices = @transform_2, window_bounds = array<i64: 128, 32>}, {pipeline_mode = #tpu.pipeline_mode<synchronous>, transform_indices = @transform_3, window_bounds = array<i64: 128, 32>}, {pipeline_mode = #tpu.pipeline_mode<synchronous>, transform_indices = @transform_4, window_bounds = array<i64: 1, 128>}, {pipeline_mode = #tpu.pipeline_mode<synchronous>, transform_indices = @transform_5, window_bounds = array<i64: 1, 128>}, {pipeline_mode = #tpu.pipeline_mode<synchronous>, transform_indices = @transform_6, window_bounds = array<i64: 1, 128>}, {transform_indices = @transform_7, window_bounds = array<i64: 16, 128>}]} {
    %c0_i32 = arith.constant 0 : i32
    %0 = arith.cmpi eq, %arg0, %c0_i32 : i32
    %1 = arith.extui %0 : i1 to i32
    %c0_i32_0 = arith.constant 0 : i32
    %2 = arith.cmpi ne, %1, %c0_i32_0 : i32
    scf.if %2 {
      %c0_8 = arith.constant 0 : index
      %c0_9 = arith.constant 0 : index
      %10 = vector.load %arg2[%c0_8, %c0_9] : memref<128x32xf32, #tpu.memory_space<vmem>>, vector<128x32xf32>
      %c0_10 = arith.constant 0 : index
      %c0_11 = arith.constant 0 : index
      %11 = vector.load %arg3[%c0_10, %c0_11] : memref<128x32xf32, #tpu.memory_space<vmem>>, vector<128x32xf32>
      %cst_12 = arith.constant 2.000000e+01 : f32
      %12 = vector.broadcast %cst_12 : f32 to vector<128x32xf32>
      %13 = arith.minimumf %11, %12 : vector<128x32xf32>
      %cst_13 = arith.constant 2.000000e+01 : f32
      %14 = vector.broadcast %cst_13 : f32 to vector<128x32xf32>
      %15 = arith.cmpf ogt, %11, %14 : vector<128x32xf32>
      %16 = math.exp %13 : vector<128x32xf32>
      %17 = math.log1p %16 : vector<128x32xf32>
      %18 = arith.select %15, %11, %17 : vector<128x32xi1>, vector<128x32xf32>
      %c0_14 = arith.constant 0 : index
      %c0_15 = arith.constant 0 : index
      %19 = vector.load %arg4[%c0_14, %c0_15] : memref<128x32xf32, #tpu.memory_space<vmem>>, vector<128x32xf32>
      %20 = arith.mulf %18, %19 : vector<128x32xf32>
      %21 = arith.addf %10, %20 : vector<128x32xf32>
      %c0_16 = arith.constant 0 : index
      %c0_17 = arith.constant 0 : index
      %22 = vector.load %arg9[%c0_16, %c0_17] : memref<128x32xf32, #tpu.memory_space<vmem>>, vector<128x32xf32>
      tpu.vector_store %arg9[%c0_16, %c0_17], %21 {strides = array<i32>} : memref<128x32xf32, #tpu.memory_space<vmem>>, vector<128x32xf32>,
      %c0_18 = arith.constant 0 : index
      %c0_19 = arith.constant 0 : index
      %23 = vector.load %arg5[%c0_18, %c0_19] : memref<1x128xf32, #tpu.memory_space<vmem>>, vector<1x128xf32>
      %c0_20 = arith.constant 0 : index
      %c0_21 = arith.constant 0 : index
      %24 = vector.load %arg6[%c0_20, %c0_21] : memref<1x128xf32, #tpu.memory_space<vmem>>, vector<1x128xf32>
      %cst_22 = arith.constant 2.000000e+01 : f32
      %25 = vector.broadcast %cst_22 : f32 to vector<1x128xf32>
      %26 = arith.minimumf %24, %25 : vector<1x128xf32>
      %cst_23 = arith.constant 2.000000e+01 : f32
      %27 = vector.broadcast %cst_23 : f32 to vector<1x128xf32>
      %28 = arith.cmpf ogt, %24, %27 : vector<1x128xf32>
      %29 = math.exp %26 : vector<1x128xf32>
      %30 = math.log1p %29 : vector<1x128xf32>
      %31 = arith.select %28, %24, %30 : vector<1x128xi1>, vector<1x128xf32>
      %c0_24 = arith.constant 0 : index
      %c0_25 = arith.constant 0 : index
      %32 = vector.load %arg7[%c0_24, %c0_25] : memref<1x128xf32, #tpu.memory_space<vmem>>, vector<1x128xf32>
      %33 = arith.mulf %31, %32 : vector<1x128xf32>
      %34 = arith.addf %23, %33 : vector<1x128xf32>
      %c0_26 = arith.constant 0 : index
      %c0_27 = arith.constant 0 : index
      %35 = vector.load %arg10[%c0_26, %c0_27] : memref<1x128xf32, #tpu.memory_space<vmem>>, vector<1x128xf32>
      tpu.vector_store %arg10[%c0_26, %c0_27], %34 {strides = array<i32>} : memref<1x128xf32, #tpu.memory_space<vmem>>, vector<1x128xf32>,
    } else {
    }
    %c0 = arith.constant 0 : index
    %c0_1 = arith.constant 0 : index
    %3 = vector.load %arg1[%c0, %c0_1] : memref<16x32xf32, #tpu.memory_space<vmem>>, vector<16x32xf32>
    %c0_2 = arith.constant 0 : index
    %c0_3 = arith.constant 0 : index
    %4 = vector.load %arg9[%c0_2, %c0_3] : memref<128x32xf32, #tpu.memory_space<vmem>>, vector<128x32xf32>
    %cst = arith.constant dense<0.000000e+00> : vector<16x128xf32>
    %5 = tpu.matmul %3, %4, %cst {dimension_numbers = #tpu.dot_dimension_numbers<[1], [1], [0], [0], [0, 0, 1, 0], [], []>} : vector<16x32xf32>, vector<128x32xf32>, vector<16x128xf32> -> vector<16x128xf32>
    %c0_4 = arith.constant 0 : index
    %c0_5 = arith.constant 0 : index
    %6 = vector.load %arg10[%c0_4, %c0_5] : memref<1x128xf32, #tpu.memory_space<vmem>>, vector<1x128xf32>
    %7 = vector.broadcast %6 : vector<1x128xf32> to vector<16x128xf32>
    %8 = arith.addf %5, %7 : vector<16x128xf32>
    %c0_6 = arith.constant 0 : index
    %c0_7 = arith.constant 0 : index
    %9 = vector.load %arg8[%c0_6, %c0_7] : memref<16x128xf32, #tpu.memory_space<vmem>>, vector<16x128xf32>
    tpu.vector_store %arg8[%c0_6, %c0_7], %8 {strides = array<i32>} : memref<16x128xf32, #tpu.memory_space<vmem>>, vector<16x128xf32>,
    return
  }
  func.func @transform_0(%arg0: i32) -> (i32, i32) {
    %c0_i32 = arith.constant 0 : i32
    %c0_i32_0 = arith.constant 0 : i32
    return %arg0, %c0_i32 : i32, i32
  }
  func.func @transform_1(%arg0: i32) -> (i32, i32) {
    %c0_i32 = arith.constant 0 : i32
    %c0_i32_0 = arith.constant 0 : i32
    %c0_i32_1 = arith.constant 0 : i32
    return %c0_i32, %c0_i32_0 : i32, i32
  }
  func.func @transform_2(%arg0: i32) -> (i32, i32) {
    %c0_i32 = arith.constant 0 : i32
    %c0_i32_0 = arith.constant 0 : i32
    %c0_i32_1 = arith.constant 0 : i32
    return %c0_i32, %c0_i32_0 : i32, i32
  }
  func.func @transform_3(%arg0: i32) -> (i32, i32) {
    %c0_i32 = arith.constant 0 : i32
    %c0_i32_0 = arith.constant 0 : i32
    %c0_i32_1 = arith.constant 0 : i32
    return %c0_i32, %c0_i32_0 : i32, i32
  }
  func.func @transform_4(%arg0: i32) -> (i32, i32) {
    %c0_i32 = arith.constant 0 : i32
    %c0_i32_0 = arith.constant 0 : i32
    %c0_i32_1 = arith.constant 0 : i32
    return %c0_i32, %c0_i32_0 : i32, i32
  }
  func.func @transform_5(%arg0: i32) -> (i32, i32) {
    %c0_i32 = arith.constant 0 : i32
    %c0_i32_0 = arith.constant 0 : i32
    %c0_i32_1 = arith.constant 0 : i32
    return %c0_i32, %c0_i32_0 : i32, i32
  }
  func.func @transform_6(%arg0: i32) -> (i32, i32) {
    %c0_i32 = arith.constant 0 : i32
    %c0_i32_0 = arith.constant 0 : i32
    %c0_i32_1 = arith.constant 0 : i32
    return %c0_i32, %c0_i32_0 : i32, i32
  }
  func.func @transform_7(%arg0: i32) -> (i32, i32) {
    %c0_i32 = arith.constant 0 : i32
    %c0_i32_0 = arith.constant 0 : i32
    return %arg0, %c0_i32 : i32, i32
  }
}

</mosaic_0001>

<llo_original>
// kernel: linearvb_forward.1
$region0: #{linearvb_forward.1}
  #allocation0 [shape = 'u32[]', space=smem, size = 0x4, offset = 0x4, fixed_abs, tag = 'smem constant byte address 0x4 - core index']
  #allocation1 [shape = 'u32[144,128]{1,0:T(1,128)}', space=vmem, size = 0x12000, scoped, tag = 'internal scratch']
  #allocation2 [shape = 'f32[128,32]{1,0:T(8,128)}', space=vmem, size = 0x10000, scoped, tag = 'scratch operand']
  #allocation3 [shape = 'f32[1,128]{1,0:T(1,128)}', space=vmem, size = 0x200, scoped, tag = 'scratch operand']
  %s0 = inlined_call_operand.vmem [shape: f32[16,32], index: 0, kind: input, shape index: {}]
  %s1 = inlined_call_operand.vmem [shape: f32[128,32], index: 1, kind: input, shape index: {}]
  %s2 = inlined_call_operand.vmem [shape: f32[128,32], index: 2, kind: input, shape index: {}]
  %s3 = inlined_call_operand.vmem [shape: f32[128,32], index: 3, kind: input, shape index: {}]
  %s4 = inlined_call_operand.vmem [shape: f32[1,128], index: 4, kind: input, shape index: {}]
  %s5 = inlined_call_operand.vmem [shape: f32[1,128], index: 5, kind: input, shape index: {}]
  %s6 = inlined_call_operand.vmem [shape: f32[1,128], index: 6, kind: input, shape index: {}]
  %s7 = inlined_call_operand.hbm [shape: f32[16,128], index: 7, kind: output, shape index: {}]
  %s8 = sld [smem:[#allocation0]]
  $region42: #{linearvb_forward.1} parent=0
    _
  %s10 = ssub.s32 1, %s8
  %s11 = scalar_select 0, %s10, %s8
  $region1: #{linearvb_forward.1} parent=0
    #allocation4 [shape = 'u8[8192]{0}', space=vmem, size = 0x2000, scoped, tag = 'output window, operand 0, single buffered']
    #allocation5 [shape = 's32[1]{0}', space=sflag, size = 0x4, scoped, tag = 'scoped memory for linearvb_forward.1']
    %12 = vsyncpa [#allocation5], 0
    // Predicated region
    $region2: #{linearvb_forward.1} parent=1 // pred_check
      _
    $region3: #{linearvb_forward.1} parent=1 // pred_check_branch
      %14 = sbr.rel (0) target = $region5
    $region4: #{linearvb_forward.1} parent=1 // pred_region
      _
    $region5: #{linearvb_forward.1} parent=1 // pred_fallthru
      _
    // Predicated region
    $region6: #{linearvb_forward.1} parent=1 // pred_check
      _
    $region7: #{linearvb_forward.1} parent=1 // pred_check_branch
      %16 = sbr.rel (0) target = $region9
    $region8: #{linearvb_forward.1} parent=1 // pred_region
      _
    $region9: #{linearvb_forward.1} parent=1 // pred_fallthru
      _
    // Predicated region
    $region10: #{linearvb_forward.1} parent=1 // pred_check
      _
    $region11: #{linearvb_forward.1} parent=1 // pred_check_branch
      %18 = sbr.rel (0) target = $region13
    $region12: #{linearvb_forward.1} parent=1 // pred_region
      _
    $region13: #{linearvb_forward.1} parent=1 // pred_fallthru
      _
    // Predicated region
    $region14: #{linearvb_forward.1} parent=1 // pred_check
      _
    $region15: #{linearvb_forward.1} parent=1 // pred_check_branch
      %20 = sbr.rel (0) target = $region17
    $region16: #{linearvb_forward.1} parent=1 // pred_region
      _
    $region17: #{linearvb_forward.1} parent=1 // pred_fallthru
      _
    // Predicated region
    $region18: #{linearvb_forward.1} parent=1 // pred_check
      _
    $region19: #{linearvb_forward.1} parent=1 // pred_check_branch
      %22 = sbr.rel (0) target = $region21
    $region20: #{linearvb_forward.1} parent=1 // pred_region
      _
    $region21: #{linearvb_forward.1} parent=1 // pred_fallthru
      _
    // Predicated region
    $region22: #{linearvb_forward.1} parent=1 // pred_check
      _
    $region23: #{linearvb_forward.1} parent=1 // pred_check_branch
      %24 = sbr.rel (0) target = $region25
    $region24: #{linearvb_forward.1} parent=1 // pred_region
      _
    $region25: #{linearvb_forward.1} parent=1 // pred_fallthru
      _
    // Predicated region
    $region26: #{linearvb_forward.1} parent=1 // pred_check
      _
    $region27: #{linearvb_forward.1} parent=1 // pred_check_branch
      %26 = sbr.rel (0) target = $region29
    $region28: #{linearvb_forward.1} parent=1 // pred_region
      _
    $region29: #{linearvb_forward.1} parent=1 // pred_fallthru
      _
    %p27 = scmp.eq.s32.totalorder 0, 0
    // Predicated region
    $region30: #{linearvb_forward.1} parent=1 // pred_check
      %p28 = pneg %p27
    $region31: #{linearvb_forward.1} parent=1 // pred_check_branch
      %30 = sbr.rel (%p28) target = $region33
    $region32: #{linearvb_forward.1} parent=1 // pred_region
      %v31 = vld [vmem:[%s1] sm:$0xff]
      %v32 = vld [vmem:[%s1 + $0x8] sm:$0xff]
      %v33 = vld [vmem:[%s1 + $0x10] sm:$0xff]
      %v34 = vld [vmem:[%s1 + $0x18] sm:$0xff]
      %v35 = vld [vmem:[%s1 + $0x20] sm:$0xff]
      %v36 = vld [vmem:[%s1 + $0x28] sm:$0xff]
      %v37 = vld [vmem:[%s1 + $0x30] sm:$0xff]
      %v38 = vld [vmem:[%s1 + $0x38] sm:$0xff]
      %v39 = vld [vmem:[%s1 + $0x40] sm:$0xff]
      %v40 = vld [vmem:[%s1 + $0x48] sm:$0xff]
      %v41 = vld [vmem:[%s1 + $0x50] sm:$0xff]
      %v42 = vld [vmem:[%s1 + $0x58] sm:$0xff]
      %v43 = vld [vmem:[%s1 + $0x60] sm:$0xff]
      %v44 = vld [vmem:[%s1 + $0x68] sm:$0xff]
      %v45 = vld [vmem:[%s1 + $0x70] sm:$0xff]
      %v46 = vld [vmem:[%s1 + $0x78] sm:$0xff]
      %v47 = vld [vmem:[%s2] sm:$0xff]
      %v48 = vld [vmem:[%s2 + $0x8] sm:$0xff]
      %v49 = vld [vmem:[%s2 + $0x10] sm:$0xff]
      %v50 = vld [vmem:[%s2 + $0x18] sm:$0xff]
      %v51 = vld [vmem:[%s2 + $0x20] sm:$0xff]
      %v52 = vld [vmem:[%s2 + $0x28] sm:$0xff]
      %v53 = vld [vmem:[%s2 + $0x30] sm:$0xff]
      %v54 = vld [vmem:[%s2 + $0x38] sm:$0xff]
      %v55 = vld [vmem:[%s2 + $0x40] sm:$0xff]
      %v56 = vld [vmem:[%s2 + $0x48] sm:$0xff]
      %v57 = vld [vmem:[%s2 + $0x50] sm:$0xff]
      %v58 = vld [vmem:[%s2 + $0x58] sm:$0xff]
      %v59 = vld [vmem:[%s2 + $0x60] sm:$0xff]
      %v60 = vld [vmem:[%s2 + $0x68] sm:$0xff]
      %v61 = vld [vmem:[%s2 + $0x70] sm:$0xff]
      %v62 = vld [vmem:[%s2 + $0x78] sm:$0xff]
      %v63 = vmin.f32 %v47, 20.0
      %v64 = vmin.f32 %v48, 20.0
      %v65 = vmin.f32 %v49, 20.0
      %v66 = vmin.f32 %v50, 20.0
      %v67 = vmin.f32 %v51, 20.0
      %v68 = vmin.f32 %v52, 20.0
      %v69 = vmin.f32 %v53, 20.0
      %v70 = vmin.f32 %v54, 20.0
      %v71 = vmin.f32 %v55, 20.0
      %v72 = vmin.f32 %v56, 20.0
      %v73 = vmin.f32 %v57, 20.0
      %v74 = vmin.f32 %v58, 20.0
      %v75 = vmin.f32 %v59, 20.0
      %v76 = vmin.f32 %v60, 20.0
      %v77 = vmin.f32 %v61, 20.0
      %v78 = vmin.f32 %v62, 20.0
      %vm79 = vcmp.gt.f32.partialorder %v47, 20.0
      %vm80 = vcmp.gt.f32.partialorder %v48, 20.0
      %vm81 = vcmp.gt.f32.partialorder %v49, 20.0
      %vm82 = vcmp.gt.f32.partialorder %v50, 20.0
      %vm83 = vcmp.gt.f32.partialorder %v51, 20.0
      %vm84 = vcmp.gt.f32.partialorder %v52, 20.0
      %vm85 = vcmp.gt.f32.partialorder %v53, 20.0
      %vm86 = vcmp.gt.f32.partialorder %v54, 20.0
      %vm87 = vcmp.gt.f32.partialorder %v55, 20.0
      %vm88 = vcmp.gt.f32.partialorder %v56, 20.0
      %vm89 = vcmp.gt.f32.partialorder %v57, 20.0
      %vm90 = vcmp.gt.f32.partialorder %v58, 20.0
      %vm91 = vcmp.gt.f32.partialorder %v59, 20.0
      %vm92 = vcmp.gt.f32.partialorder %v60, 20.0
      %vm93 = vcmp.gt.f32.partialorder %v61, 20.0
      %vm94 = vcmp.gt.f32.partialorder %v62, 20.0
      %v95 = vmul.f32 %v63, 1.442695
      %v96 = vpow.pop %v95
      %v97 = vmul.f32 %v64, 1.442695
      %v98 = vpow.pop %v97
      %v99 = vmul.f32 %v65, 1.442695
      %v100 = vpow.pop %v99
      %v101 = vmul.f32 %v66, 1.442695
      %v102 = vpow.pop %v101
      %v103 = vmul.f32 %v67, 1.442695
      %v104 = vpow.pop %v103
      %v105 = vmul.f32 %v68, 1.442695
      %v106 = vpow.pop %v105
      %v107 = vmul.f32 %v69, 1.442695
      %v108 = vpow.pop %v107
      %v109 = vmul.f32 %v70, 1.442695
      %v110 = vpow.pop %v109
      %v111 = vmul.f32 %v71, 1.442695
      %v112 = vpow.pop %v111
      %v113 = vmul.f32 %v72, 1.442695
      %v114 = vpow.pop %v113
      %v115 = vmul.f32 %v73, 1.442695
      %v116 = vpow.pop %v115
      %v117 = vmul.f32 %v74, 1.442695
      %v118 = vpow.pop %v117
      %v119 = vmul.f32 %v75, 1.442695
      %v120 = vpow.pop %v119
      %v121 = vmul.f32 %v76, 1.442695
      %v122 = vpow.pop %v121
      %v123 = vmul.f32 %v77, 1.442695
      %v124 = vpow.pop %v123
      %v125 = vmul.f32 %v78, 1.442695
      %v126 = vpow.pop %v125
      %v127 = vadd.f32 %v96, 1.0
      %v128 = vlog2.pop %v127
      %v129 = vmul.f32 %v128, 0.6931472
      %v130 = vmul.f32 -0.5, %v96
      %v131 = vadd.f32 %v130, 1.0
      %v132 = vmul.f32 %v131, %v96
      %v133 = vand.u32 2147483647, %v96
      %vm134 = vcmp.lt.f32.partialorder %v133, 0.0004427343
      %v135 = vsel %vm134, %v132, %v129
      %v136 = vadd.f32 %v98, 1.0
      %v137 = vlog2.pop %v136
      %v138 = vmul.f32 %v137, 0.6931472
      %v139 = vmul.f32 -0.5, %v98
      %v140 = vadd.f32 %v139, 1.0
      %v141 = vmul.f32 %v140, %v98
      %v142 = vand.u32 2147483647, %v98
      %vm143 = vcmp.lt.f32.partialorder %v142, 0.0004427343
      %v144 = vsel %vm143, %v141, %v138
      %v145 = vadd.f32 %v100, 1.0
      %v146 = vlog2.pop %v145
      %v147 = vmul.f32 %v146, 0.6931472
      %v148 = vmul.f32 -0.5, %v100
      %v149 = vadd.f32 %v148, 1.0
      %v150 = vmul.f32 %v149, %v100
      %v151 = vand.u32 2147483647, %v100
      %vm152 = vcmp.lt.f32.partialorder %v151, 0.0004427343
      %v153 = vsel %vm152, %v150, %v147
      %v154 = vadd.f32 %v102, 1.0
      %v155 = vlog2.pop %v154
      %v156 = vmul.f32 %v155, 0.6931472
      %v157 = vmul.f32 -0.5, %v102
      %v158 = vadd.f32 %v157, 1.0
      %v159 = vmul.f32 %v158, %v102
      %v160 = vand.u32 2147483647, %v102
      %vm161 = vcmp.lt.f32.partialorder %v160, 0.0004427343
      %v162 = vsel %vm161, %v159, %v156
      %v163 = vadd.f32 %v104, 1.0
      %v164 = vlog2.pop %v163
      %v165 = vmul.f32 %v164, 0.6931472
      %v166 = vmul.f32 -0.5, %v104
      %v167 = vadd.f32 %v166, 1.0
      %v168 = vmul.f32 %v167, %v104
      %v169 = vand.u32 2147483647, %v104
      %vm170 = vcmp.lt.f32.partialorder %v169, 0.0004427343
      %v171 = vsel %vm170, %v168, %v165
      %v172 = vadd.f32 %v106, 1.0
      %v173 = vlog2.pop %v172
      %v174 = vmul.f32 %v173, 0.6931472
      %v175 = vmul.f32 -0.5, %v106
      %v176 = vadd.f32 %v175, 1.0
      %v177 = vmul.f32 %v176, %v106
      %v178 = vand.u32 2147483647, %v106
      %vm179 = vcmp.lt.f32.partialorder %v178, 0.0004427343
      %v180 = vsel %vm179, %v177, %v174
      %v181 = vadd.f32 %v108, 1.0
      %v182 = vlog2.pop %v181
      %v183 = vmul.f32 %v182, 0.6931472
      %v184 = vmul.f32 -0.5, %v108
      %v185 = vadd.f32 %v184, 1.0
      %v186 = vmul.f32 %v185, %v108
      %v187 = vand.u32 2147483647, %v108
      %vm188 = vcmp.lt.f32.partialorder %v187, 0.0004427343
      %v189 = vsel %vm188, %v186, %v183
      %v190 = vadd.f32 %v110, 1.0
      %v191 = vlog2.pop %v190
      %v192 = vmul.f32 %v191, 0.6931472
      %v193 = vmul.f32 -0.5, %v110
      %v194 = vadd.f32 %v193, 1.0
      %v195 = vmul.f32 %v194, %v110
      %v196 = vand.u32 2147483647, %v110
      %vm197 = vcmp.lt.f32.partialorder %v196, 0.0004427343
      %v198 = vsel %vm197, %v195, %v192
      %v199 = vadd.f32 %v112, 1.0
      %v200 = vlog2.pop %v199
      %v201 = vmul.f32 %v200, 0.6931472
      %v202 = vmul.f32 -0.5, %v112
      %v203 = vadd.f32 %v202, 1.0
      %v204 = vmul.f32 %v203, %v112
      %v205 = vand.u32 2147483647, %v112
      %vm206 = vcmp.lt.f32.partialorder %v205, 0.0004427343
      %v207 = vsel %vm206, %v204, %v201
      %v208 = vadd.f32 %v114, 1.0
      %v209 = vlog2.pop %v208
      %v210 = vmul.f32 %v209, 0.6931472
      %v211 = vmul.f32 -0.5, %v114
      %v212 = vadd.f32 %v211, 1.0
      %v213 = vmul.f32 %v212, %v114
      %v214 = vand.u32 2147483647, %v114
      %vm215 = vcmp.lt.f32.partialorder %v214, 0.0004427343
      %v216 = vsel %vm215, %v213, %v210
      %v217 = vadd.f32 %v116, 1.0
      %v218 = vlog2.pop %v217
      %v219 = vmul.f32 %v218, 0.6931472
      %v220 = vmul.f32 -0.5, %v116
      %v221 = vadd.f32 %v220, 1.0
      %v222 = vmul.f32 %v221, %v116
      %v223 = vand.u32 2147483647, %v116
      %vm224 = vcmp.lt.f32.partialorder %v223, 0.0004427343
      %v225 = vsel %vm224, %v222, %v219
      %v226 = vadd.f32 %v118, 1.0
      %v227 = vlog2.pop %v226
      %v228 = vmul.f32 %v227, 0.6931472
      %v229 = vmul.f32 -0.5, %v118
      %v230 = vadd.f32 %v229, 1.0
      %v231 = vmul.f32 %v230, %v118
      %v232 = vand.u32 2147483647, %v118
      %vm233 = vcmp.lt.f32.partialorder %v232, 0.0004427343
      %v234 = vsel %vm233, %v231, %v228
      %v235 = vadd.f32 %v120, 1.0
      %v236 = vlog2.pop %v235
      %v237 = vmul.f32 %v236, 0.6931472
      %v238 = vmul.f32 -0.5, %v120
      %v239 = vadd.f32 %v238, 1.0
      %v240 = vmul.f32 %v239, %v120
      %v241 = vand.u32 2147483647, %v120
      %vm242 = vcmp.lt.f32.partialorder %v241, 0.0004427343
      %v243 = vsel %vm242, %v240, %v237
      %v244 = vadd.f32 %v122, 1.0
      %v245 = vlog2.pop %v244
      %v246 = vmul.f32 %v245, 0.6931472
      %v247 = vmul.f32 -0.5, %v122
      %v248 = vadd.f32 %v247, 1.0
      %v249 = vmul.f32 %v248, %v122
      %v250 = vand.u32 2147483647, %v122
      %vm251 = vcmp.lt.f32.partialorder %v250, 0.0004427343
      %v252 = vsel %vm251, %v249, %v246
      %v253 = vadd.f32 %v124, 1.0
      %v254 = vlog2.pop %v253
      %v255 = vmul.f32 %v254, 0.6931472
      %v256 = vmul.f32 -0.5, %v124
      %v257 = vadd.f32 %v256, 1.0
      %v258 = vmul.f32 %v257, %v124
      %v259 = vand.u32 2147483647, %v124
      %vm260 = vcmp.lt.f32.partialorder %v259, 0.0004427343
      %v261 = vsel %vm260, %v258, %v255
      %v262 = vadd.f32 %v126, 1.0
      %v263 = vlog2.pop %v262
      %v264 = vmul.f32 %v263, 0.6931472
      %v265 = vmul.f32 -0.5, %v126
      %v266 = vadd.f32 %v265, 1.0
      %v267 = vmul.f32 %v266, %v126
      %v268 = vand.u32 2147483647, %v126
      %vm269 = vcmp.lt.f32.partialorder %v268, 0.0004427343
      %v270 = vsel %vm269, %v267, %v264
      %v271 = vsel %vm79, %v47, %v135
      %v272 = vsel %vm80, %v48, %v144
      %v273 = vsel %vm81, %v49, %v153
      %v274 = vsel %vm82, %v50, %v162
      %v275 = vsel %vm83, %v51, %v171
      %v276 = vsel %vm84, %v52, %v180
      %v277 = vsel %vm85, %v53, %v189
      %v278 = vsel %vm86, %v54, %v198
      %v279 = vsel %vm87, %v55, %v207
      %v280 = vsel %vm88, %v56, %v216
      %v281 = vsel %vm89, %v57, %v225
      %v282 = vsel %vm90, %v58, %v234
      %v283 = vsel %vm91, %v59, %v243
      %v284 = vsel %vm92, %v60, %v252
      %v285 = vsel %vm93, %v61, %v261
      %v286 = vsel %vm94, %v62, %v270
      %v287 = vld [vmem:[%s3] sm:$0xff]
      %v288 = vld [vmem:[%s3 + $0x8] sm:$0xff]
      %v289 = vld [vmem:[%s3 + $0x10] sm:$0xff]
      %v290 = vld [vmem:[%s3 + $0x18] sm:$0xff]
      %v291 = vld [vmem:[%s3 + $0x20] sm:$0xff]
      %v292 = vld [vmem:[%s3 + $0x28] sm:$0xff]
      %v293 = vld [vmem:[%s3 + $0x30] sm:$0xff]
      %v294 = vld [vmem:[%s3 + $0x38] sm:$0xff]
      %v295 = vld [vmem:[%s3 + $0x40] sm:$0xff]
      %v296 = vld [vmem:[%s3 + $0x48] sm:$0xff]
      %v297 = vld [vmem:[%s3 + $0x50] sm:$0xff]
      %v298 = vld [vmem:[%s3 + $0x58] sm:$0xff]
      %v299 = vld [vmem:[%s3 + $0x60] sm:$0xff]
      %v300 = vld [vmem:[%s3 + $0x68] sm:$0xff]
      %v301 = vld [vmem:[%s3 + $0x70] sm:$0xff]
      %v302 = vld [vmem:[%s3 + $0x78] sm:$0xff]
      %v303 = vmul.f32 %v271, %v287
      %v304 = vmul.f32 %v272, %v288
      %v305 = vmul.f32 %v273, %v289
      %v306 = vmul.f32 %v274, %v290
      %v307 = vmul.f32 %v275, %v291
      %v308 = vmul.f32 %v276, %v292
      %v309 = vmul.f32 %v277, %v293
      %v310 = vmul.f32 %v278, %v294
      %v311 = vmul.f32 %v279, %v295
      %v312 = vmul.f32 %v280, %v296
      %v313 = vmul.f32 %v281, %v297
      %v314 = vmul.f32 %v282, %v298
      %v315 = vmul.f32 %v283, %v299
      %v316 = vmul.f32 %v284, %v300
      %v317 = vmul.f32 %v285, %v301
      %v318 = vmul.f32 %v286, %v302
      %v319 = vadd.f32 %v31, %v303
      %v320 = vadd.f32 %v32, %v304
      %v321 = vadd.f32 %v33, %v305
      %v322 = vadd.f32 %v34, %v306
      %v323 = vadd.f32 %v35, %v307
      %v324 = vadd.f32 %v36, %v308
      %v325 = vadd.f32 %v37, %v309
      %v326 = vadd.f32 %v38, %v310
      %v327 = vadd.f32 %v39, %v311
      %v328 = vadd.f32 %v40, %v312
      %v329 = vadd.f32 %v41, %v313
      %v330 = vadd.f32 %v42, %v314
      %v331 = vadd.f32 %v43, %v315
      %v332 = vadd.f32 %v44, %v316
      %v333 = vadd.f32 %v45, %v317
      %v334 = vadd.f32 %v46, %v318
      %vm335 = vcmask 261120
      %336 = vst.msk [vmem:[#allocation2] sm:$0xff] %vm335, %v319
      %337 = vst.msk [vmem:[#allocation2 + $0x8] sm:$0xff] %vm335, %v320
      %338 = vst.msk [vmem:[#allocation2 + $0x10] sm:$0xff] %vm335, %v321
      %339 = vst.msk [vmem:[#allocation2 + $0x18] sm:$0xff] %vm335, %v322
      %340 = vst.msk [vmem:[#allocation2 + $0x20] sm:$0xff] %vm335, %v323
      %341 = vst.msk [vmem:[#allocation2 + $0x28] sm:$0xff] %vm335, %v324
      %342 = vst.msk [vmem:[#allocation2 + $0x30] sm:$0xff] %vm335, %v325
      %343 = vst.msk [vmem:[#allocation2 + $0x38] sm:$0xff] %vm335, %v326
      %344 = vst.msk [vmem:[#allocation2 + $0x40] sm:$0xff] %vm335, %v327
      %345 = vst.msk [vmem:[#allocation2 + $0x48] sm:$0xff] %vm335, %v328
      %346 = vst.msk [vmem:[#allocation2 + $0x50] sm:$0xff] %vm335, %v329
      %347 = vst.msk [vmem:[#allocation2 + $0x58] sm:$0xff] %vm335, %v330
      %348 = vst.msk [vmem:[#allocation2 + $0x60] sm:$0xff] %vm335, %v331
      %349 = vst.msk [vmem:[#allocation2 + $0x68] sm:$0xff] %vm335, %v332
      %350 = vst.msk [vmem:[#allocation2 + $0x70] sm:$0xff] %vm335, %v333
      %351 = vst.msk [vmem:[#allocation2 + $0x78] sm:$0xff] %vm335, %v334
      %v352 = vld [vmem:[%s4] sm:$0x1]
      %v353 = vld [vmem:[%s5] sm:$0x1]
      %v354 = vmin.f32 %v353, 20.0
      %vm355 = vcmp.gt.f32.partialorder %v353, 20.0
      %v356 = vmul.f32 %v354, 1.442695
      %v357 = vpow.pop %v356
      %v358 = vadd.f32 %v357, 1.0
      %v359 = vlog2.pop %v358
      %v360 = vmul.f32 %v359, 0.6931472
      %v361 = vmul.f32 -0.5, %v357
      %v362 = vadd.f32 %v361, 1.0
      %v363 = vmul.f32 %v362, %v357
      %v364 = vand.u32 2147483647, %v357
      %vm365 = vcmp.lt.f32.partialorder %v364, 0.0004427343
      %v366 = vsel %vm365, %v363, %v360
      %v367 = vsel %vm355, %v353, %v366
      %v368 = vld [vmem:[%s6] sm:$0x1]
      %v369 = vmul.f32 %v367, %v368
      %v370 = vadd.f32 %v352, %v369
      %371 = vst [vmem:[#allocation3] sm:$0x1] %v370
    $region33: #{linearvb_forward.1} parent=1 // pred_fallthru
      _
    %v372 = vld [vmem:[%s0] sm:$0xff]
    %v373 = vld [vmem:[%s0 + $0x8] sm:$0xff]
    %v374 = vld [vmem:[#allocation2] sm:$0xff]
    %v375 = vld [vmem:[#allocation2 + $0x8] sm:$0xff]
    %v376 = vld [vmem:[#allocation2 + $0x10] sm:$0xff]
    %v377 = vld [vmem:[#allocation2 + $0x18] sm:$0xff]
    %v378 = vld [vmem:[#allocation2 + $0x20] sm:$0xff]
    %v379 = vld [vmem:[#allocation2 + $0x28] sm:$0xff]
    %v380 = vld [vmem:[#allocation2 + $0x30] sm:$0xff]
    %v381 = vld [vmem:[#allocation2 + $0x38] sm:$0xff]
    %v382 = vld [vmem:[#allocation2 + $0x40] sm:$0xff]
    %v383 = vld [vmem:[#allocation2 + $0x48] sm:$0xff]
    %v384 = vld [vmem:[#allocation2 + $0x50] sm:$0xff]
    %v385 = vld [vmem:[#allocation2 + $0x58] sm:$0xff]
    %v386 = vld [vmem:[#allocation2 + $0x60] sm:$0xff]
    %v387 = vld [vmem:[#allocation2 + $0x68] sm:$0xff]
    %v388 = vld [vmem:[#allocation2 + $0x70] sm:$0xff]
    %v389 = vld [vmem:[#allocation2 + $0x78] sm:$0xff]
    %v390 = vld [vmem:[#allocation3] sm:$0x1]
    %v392 = vlaneseq
    %v393 = vshrl.u32 %v392, 7
    %v394 = vsub.s32 0, %v393
    %v395 = vrot.slane %v390, %v394
    %vm397 = vcmask 261120
    %v399 = vsel %vm397, %v372, 0
    %v402 = vsel %vm397, %v373, 0
    %v405 = vsel %vm397, %v374, 0
    %v408 = vsel %vm397, %v375, 0
    %v411 = vsel %vm397, %v376, 0
    %v414 = vsel %vm397, %v377, 0
    %v417 = vsel %vm397, %v378, 0
    %v420 = vsel %vm397, %v379, 0
    %v423 = vsel %vm397, %v380, 0
    %v426 = vsel %vm397, %v381, 0
    %v429 = vsel %vm397, %v382, 0
    %v432 = vsel %vm397, %v383, 0
    %v435 = vsel %vm397, %v384, 0
    %v438 = vsel %vm397, %v385, 0
    %v441 = vsel %vm397, %v386, 0
    %v444 = vsel %vm397, %v387, 0
    %v447 = vsel %vm397, %v388, 0
    %v450 = vsel %vm397, %v389, 0
    %452 = vmatprep.subr.mxu0 0.0
    %453 = vmatpush1.xpose.msra.mxu0 %v405
    %454 = vmatprep.subr.mxu0 0.0
    %455 = vmatpush1.xpose.msra.mxu0 %v408
    %456 = vmatprep.subr.mxu0 0.0
    %457 = vmatpush1.xpose.msra.mxu0 %v411
    %458 = vmatprep.subr.mxu0 0.0
    %459 = vmatpush1.xpose.msra.mxu0 %v414
    %460 = vmatprep.subr.mxu0 0.0
    %461 = vmatpush1.xpose.msra.mxu0 %v417
    %462 = vmatprep.subr.mxu0 0.0
    %463 = vmatpush1.xpose.msra.mxu0 %v420
    %464 = vmatprep.subr.mxu0 0.0
    %465 = vmatpush1.xpose.msra.mxu0 %v423
    %466 = vmatprep.subr.mxu0 0.0
    %467 = vmatpush1.xpose.msra.mxu0 %v426
    %468 = vmatprep.subr.mxu0 0.0
    %469 = vmatpush1.xpose.msra.mxu0 %v429
    %470 = vmatprep.subr.mxu0 0.0
    %471 = vmatpush1.xpose.msra.mxu0 %v432
    %472 = vmatprep.subr.mxu0 0.0
    %473 = vmatpush1.xpose.msra.mxu0 %v435
    %474 = vmatprep.subr.mxu0 0.0
    %475 = vmatpush1.xpose.msra.mxu0 %v438
    %476 = vmatprep.subr.mxu0 0.0
    %477 = vmatpush1.xpose.msra.mxu0 %v441
    %478 = vmatprep.subr.mxu0 0.0
    %479 = vmatpush1.xpose.msra.mxu0 %v444
    %480 = vmatprep.subr.mxu0 0.0
    %481 = vmatpush1.xpose.msra.mxu0 %v447
    %482 = vmatprep.subr.mxu0 0.0
    %483 = vmatpush1.xpose.msra.mxu0 %v450
    %484 = vmatprep.subr.mxu0 0.0
    %485 = vmatpush1.xpose.msra.mxu0 0.0
    %486 = vmatprep.subr.mxu0 0.0
    %487 = vmatpush1.xpose.msra.mxu0 0.0
    %488 = vmatprep.subr.mxu0 0.0
    %489 = vmatpush1.xpose.msra.mxu0 0.0
    %490 = vmatprep.subr.mxu0 0.0
    %491 = vmatpush1.xpose.msra.mxu0 0.0
    %492 = vmatprep.subr.mxu0 0.0
    %493 = vmatpush1.xpose.msra.mxu0 0.0
    %494 = vmatprep.subr.mxu0 0.0
    %495 = vmatpush1.xpose.msra.mxu0 0.0
    %496 = vmatprep.subr.mxu0 0.0
    %497 = vmatpush1.xpose.msra.mxu0 0.0
    %498 = vmatprep.subr.mxu0 0.0
    %499 = vmatpush1.xpose.msra.mxu0 0.0
    %500 = vmatprep.subr.mxu0 0.0
    %501 = vmatpush1.xpose.msra.mxu0 0.0
    %502 = vmatprep.subr.mxu0 0.0
    %503 = vmatpush1.xpose.msra.mxu0 0.0
    %504 = vmatprep.subr.mxu0 0.0
    %505 = vmatpush1.xpose.msra.mxu0 0.0
    %506 = vmatprep.subr.mxu0 0.0
    %507 = vmatpush1.xpose.msra.mxu0 0.0
    %508 = vmatprep.subr.mxu0 0.0
    %509 = vmatpush1.xpose.msra.mxu0 0.0
    %510 = vmatprep.subr.mxu0 0.0
    %511 = vmatpush1.xpose.msra.mxu0 0.0
    %512 = vmatprep.subr.mxu0 0.0
    %513 = vmatpush1.xpose.msra.mxu0 0.0
    %514 = vmatprep.subr.mxu0 0.0
    %515 = vmatpush1.xpose.msra.mxu0 0.0
    %516 = vmatprep.mubr.f32.mxu0 0.0
    %517 = vmatmul.mubr.f32.gmra.mrb[0].mxu0 %v399
    %v518 = vpop.f32.mrb[0].mxu0
    %v519 = vadd.f32 %v395, %v518
    %v520 = vpop.f32.mrb[0].mxu0
    %521 = vmatprep.mubr.f32.mxu0 0.0
    %522 = vmatmul.mubr.f32.gmra.mrb[0].mxu0 %v402
    %v523 = vpop.f32.mrb[0].mxu0
    %v524 = vadd.f32 %v395, %v523
    %v525 = vpop.f32.mrb[0].mxu0
    %526 = vdwg.mxu0
    %527 = vst [vmem:[#allocation4] sm:$0xff] %v519
    %528 = vst [vmem:[#allocation4 + $0x8] sm:$0xff] %v524
    // Predicated region
    $region34: #{linearvb_forward.1} parent=1 // pred_check
      _
    $region35: #{linearvb_forward.1} parent=1 // pred_check_branch
      %530 = sbr.rel (0) target = $region37
    $region36: #{linearvb_forward.1} parent=1 // pred_region
      %s532 = ssub.s32 256, 256
      %533 = vsyncadd [#allocation5], %s532
      %s534 = sshll.u32 [#allocation4], 4
      %s535 = int_to_ptr.vmem [resolvable:$true] %s534
      %540 = dma.vmem_to_hbm [thread:$0]  %s535, 256, %s7, [#allocation5], 128, 128, 8
    $region37: #{linearvb_forward.1} parent=1 // pred_fallthru
      _
    // Predicated region
    $region38: #{linearvb_forward.1} parent=1 // pred_check
      _
    $region39: #{linearvb_forward.1} parent=1 // pred_check_branch
      %542 = sbr.rel (0) target = $region41
    $region40: #{linearvb_forward.1} parent=1 // pred_region
      %543 = dma.done [#allocation5], 256
    $region41: #{linearvb_forward.1} parent=1 // pred_fallthru
      _
    %544 = vsyncpa [#allocation5], 1

</llo_original>
